<compile_context>
chip_gen: v5e
topology: v5e:2x2
jax: 0.10.0
libtpu: 0.0.40
codegen_flags: <defaults>
</compile_context>

<pallas_src>
import jax
import jax.numpy as jnp
from jax import lax
from jax.experimental import pallas as pl
from jax.experimental.pallas import tpu as pltpu


def _round_up(x, m):
    return ((x + m - 1) // m) * m


def _sparse_embed_kernel(idx_ref, emb_ref, w_ref, b_ref, out_ref):
    # idx_ref : (TM, 1)  int32 tile of flattened sparse ids (VMEM)
    # emb_ref : (vocab, char_dim) f32 embedding table (VMEM, resident)
    # w_ref   : (char_dim, HP)    f32 projection weight, zero-padded to HP lanes
    # b_ref   : (1, HP)           f32 projection bias,  zero-padded to HP lanes
    # out_ref : (TM, HP)          f32 output tile (TM % 8 == 0, HP % 128 == 0)
    vocab = emb_ref.shape[0]
    tm = idx_ref.shape[0]

    # Fold the dense projection into the table per tile (tiny; avoids a second
    # pallas_call and any cross-step scratch state).
    fused = (
        jnp.dot(
            emb_ref[...],
            w_ref[...],
            preferred_element_type=jnp.float32,
            precision=lax.Precision.HIGHEST,
        )
        + b_ref[...]
    )  # (vocab, HP)

    # Clamp out-of-range ids in-kernel (free on the VPU) instead of a wrapper op.
    idx = jnp.clip(idx_ref[...], 0, vocab - 1)  # (TM, 1)

    # Batched gather expressed as a one-hot matmul on the MXU (no per-row DMA).
    onehot = (
        idx == lax.broadcasted_iota(jnp.int32, (tm, vocab), 1)
    ).astype(jnp.float32)  # (TM, vocab)

    out_ref[...] = jnp.dot(
        onehot,
        fused,
        preferred_element_type=jnp.float32,
        precision=lax.Precision.HIGHEST,
    )


def sparse_embedding_forward(user_sparse_idx, emb_table, dense_w, dense_b):
    """Pallas implementation of SparseEmbedding.forward.

    user_sparse_idx : (B, F) int32
    emb_table       : (sparse_num, char_dim) float32
    dense_w         : (char_dim, hidden_dim) float32   (== torch weight.T)
    dense_b         : (hidden_dim,) float32
    returns         : (B, F, hidden_dim) float32
    """
    B, F = user_sparse_idx.shape
    N = B * F
    sparse_num, char_dim = emb_table.shape
    hidden_dim = dense_w.shape[1]

    # Lane-dense output: pad the projection dim up to a multiple of 128.
    HP = _round_up(hidden_dim, 128)
    w_pad = jnp.pad(
        dense_w.astype(jnp.float32), ((0, 0), (0, HP - hidden_dim))
    )
    b_pad = jnp.pad(
        dense_b.astype(jnp.float32), (0, HP - hidden_dim)
    ).reshape(1, HP)

    # Row tile: multiple of 8 (sublane-dense stores), capped at 256; aim for a
    # grid with >= 2 steps when N allows it so both v7x TensorCores get work.
    TM = min(256, max(8, _round_up((N + 1) // 2, 8)))
    N_pad = _round_up(N, TM)

    idx_flat = user_sparse_idx.reshape(N).astype(jnp.int32)
    idx_padded = jnp.pad(idx_flat, (0, N_pad - N)).reshape(N_pad, 1)

    out = pl.pallas_call(
        _sparse_embed_kernel,
        out_shape=jax.ShapeDtypeStruct((N_pad, HP), jnp.float32),
        grid=(N_pad // TM,),
        in_specs=[
            # TM indices per step.
            pl.BlockSpec((TM, 1), lambda i: (i, 0)),
            # Parameters resident in VMEM across the whole grid.
            pl.BlockSpec((sparse_num, char_dim), lambda i: (0, 0)),
            pl.BlockSpec((char_dim, HP), lambda i: (0, 0)),
            pl.BlockSpec((1, HP), lambda i: (0, 0)),
        ],
        out_specs=pl.BlockSpec((TM, HP), lambda i: (i, 0)),
        compiler_params=pltpu.CompilerParams(
            # Independent row tiles; safe to shard across v7x's two TCs.
            dimension_semantics=("parallel",)
        ),
    )(idx_padded, emb_table.astype(jnp.float32), w_pad, b_pad)

    return out[:N, :hidden_dim].reshape(B, F, hidden_dim)


def make_params(sparse_num, char_dim, hidden_dim, key):
    """Deterministic parameter init mirroring the module's __init__ shapes."""
    k_emb, k_w, k_b = jax.random.split(key, 3)
    # random_embedding: uniform(-scale, scale), scale = sqrt(3 / char_dim)
    scale = jnp.sqrt(3.0 / char_dim)
    emb_table = jax.random.uniform(
        k_emb, (sparse_num, char_dim), jnp.float32, minval=-scale, maxval=scale)
    # nn.Linear default init: U(-1/sqrt(in), 1/sqrt(in)) for weight and bias
    bound = 1.0 / jnp.sqrt(char_dim)
    dense_w = jax.random.uniform(
        k_w, (char_dim, hidden_dim), jnp.float32, minval=-bound, maxval=bound)
    dense_b = jax.random.uniform(
        k_b, (hidden_dim,), jnp.float32, minval=-bound, maxval=bound)
    return emb_table, dense_w, dense_b


if __name__ == "__main__":
    # Small shapes consistent with the module: a handful of sparse categorical
    # features per user (gender / verify / vip / education / place / bucketed counts).
    sparse_num = 30     # vocabulary of sparse category ids
    char_dim = 32       # embedding dim
    hidden_dim = 64     # dense projection dim
    batch = 4
    num_feats = 6

    key = jax.random.PRNGKey(0)
    k_idx, k_params = jax.random.split(key)

    user_sparse_idx = jax.random.randint(
        k_idx, (batch, num_feats), minval=0, maxval=sparse_num, dtype=jnp.int32)
    emb_table, dense_w, dense_b = make_params(sparse_num, char_dim, hidden_dim, k_params)

    out = sparse_embedding_forward(user_sparse_idx, emb_table, dense_w, dense_b)
    out = jax.block_until_ready(out)

    # Pure-JAX reference check (gather + linear).
    ref = jnp.take(emb_table, user_sparse_idx, axis=0) @ dense_w + dense_b
    assert out.shape == (batch, num_feats, hidden_dim)
    assert jnp.allclose(out, ref, atol=1e-5, rtol=1e-5)

    print("KERNEL_OK")
</pallas_src>

<mosaic_0001>
module attributes {stable_mosaic.version = 11 : i64} {
  func.func @_sparse_embed_kernel(%arg0: i32, %arg1: memref<16x1xi32, #tpu.memory_space<vmem>>, %arg2: memref<30x32xf32, #tpu.memory_space<vmem>>, %arg3: memref<32x128xf32, #tpu.memory_space<vmem>>, %arg4: memref<1x128xf32, #tpu.memory_space<vmem>>, %arg5: memref<16x128xf32, #tpu.memory_space<vmem>>) attributes {dimension_semantics = [#tpu.dimension_semantics<parallel>], iteration_bounds = array<i64: 2>, scalar_prefetch = 0 : i64, scratch_operands = 0 : i64, tpu.core_type = #tpu.core_type<tc>, window_params = [{transform_indices = @transform_0, window_bounds = array<i64: 16, 1>}, {pipeline_mode = #tpu.pipeline_mode<synchronous>, transform_indices = @transform_1, window_bounds = array<i64: 30, 32>}, {pipeline_mode = #tpu.pipeline_mode<synchronous>, transform_indices = @transform_2, window_bounds = array<i64: 32, 128>}, {pipeline_mode = #tpu.pipeline_mode<synchronous>, transform_indices = @transform_3, window_bounds = array<i64: 1, 128>}, {transform_indices = @transform_4, window_bounds = array<i64: 16, 128>}]} {
    %c0 = arith.constant 0 : index
    %c0_0 = arith.constant 0 : index
    %0 = vector.load %arg2[%c0, %c0_0] : memref<30x32xf32, #tpu.memory_space<vmem>>, vector<30x32xf32>
    %c0_1 = arith.constant 0 : index
    %c0_2 = arith.constant 0 : index
    %1 = vector.load %arg3[%c0_1, %c0_2] : memref<32x128xf32, #tpu.memory_space<vmem>>, vector<32x128xf32>
    %cst = arith.constant dense<0.000000e+00> : vector<30x128xf32>
    %2 = tpu.matmul %0, %1, %cst {dimension_numbers = #tpu.dot_dimension_numbers<[1], [0], [0], [1], [0, 0, 1, 1], [], []>, precision = #tpu.contract_precision<fp32>} : vector<30x32xf32>, vector<32x128xf32>, vector<30x128xf32> -> vector<30x128xf32>
    %c0_3 = arith.constant 0 : index
    %c0_4 = arith.constant 0 : index
    %3 = vector.load %arg4[%c0_3, %c0_4] : memref<1x128xf32, #tpu.memory_space<vmem>>, vector<1x128xf32>
    %4 = vector.broadcast %3 : vector<1x128xf32> to vector<30x128xf32>
    %5 = arith.addf %2, %4 : vector<30x128xf32>
    %c0_5 = arith.constant 0 : index
    %c0_6 = arith.constant 0 : index
    %6 = vector.load %arg1[%c0_5, %c0_6] : memref<16x1xi32, #tpu.memory_space<vmem>>, vector<16x1xi32>
    %c0_i32 = arith.constant 0 : i32
    %c29_i32 = arith.constant 29 : i32
    %7 = vector.broadcast %c0_i32 : i32 to vector<16x1xi32>
    %8 = arith.maxsi %7, %6 : vector<16x1xi32>
    %9 = vector.broadcast %c29_i32 : i32 to vector<16x1xi32>
    %10 = arith.minsi %9, %8 : vector<16x1xi32>
    %11 = tpu.iota {dimensions = array<i32: 1>} : vector<16x30xi32>
    %12 = vector.broadcast %10 : vector<16x1xi32> to vector<16x30xi32>
    %13 = arith.cmpi eq, %12, %11 : vector<16x30xi32>
    %14 = arith.extui %13 : vector<16x30xi1> to vector<16x30xi32>
    %15 = arith.sitofp %14 : vector<16x30xi32> to vector<16x30xf32>
    %cst_7 = arith.constant dense<0.000000e+00> : vector<16x128xf32>
    %16 = tpu.matmul %15, %5, %cst_7 {dimension_numbers = #tpu.dot_dimension_numbers<[1], [0], [0], [1], [0, 0, 1, 1], [], []>, precision = #tpu.contract_precision<fp32>} : vector<16x30xf32>, vector<30x128xf32>, vector<16x128xf32> -> vector<16x128xf32>
    %c0_8 = arith.constant 0 : index
    %c0_9 = arith.constant 0 : index
    %17 = vector.load %arg5[%c0_8, %c0_9] : memref<16x128xf32, #tpu.memory_space<vmem>>, vector<16x128xf32>
    tpu.vector_store %arg5[%c0_8, %c0_9], %16 {strides = array<i32>} : memref<16x128xf32, #tpu.memory_space<vmem>>, vector<16x128xf32>,
    return
  }
  func.func @transform_0(%arg0: i32) -> (i32, i32) {
    %c0_i32 = arith.constant 0 : i32
    %c0_i32_0 = arith.constant 0 : i32
    return %arg0, %c0_i32 : i32, i32
  }
  func.func @transform_1(%arg0: i32) -> (i32, i32) {
    %c0_i32 = arith.constant 0 : i32
    %c0_i32_0 = arith.constant 0 : i32
    %c0_i32_1 = arith.constant 0 : i32
    return %c0_i32, %c0_i32_0 : i32, i32
  }
  func.func @transform_2(%arg0: i32) -> (i32, i32) {
    %c0_i32 = arith.constant 0 : i32
    %c0_i32_0 = arith.constant 0 : i32
    %c0_i32_1 = arith.constant 0 : i32
    return %c0_i32, %c0_i32_0 : i32, i32
  }
  func.func @transform_3(%arg0: i32) -> (i32, i32) {
    %c0_i32 = arith.constant 0 : i32
    %c0_i32_0 = arith.constant 0 : i32
    %c0_i32_1 = arith.constant 0 : i32
    return %c0_i32, %c0_i32_0 : i32, i32
  }
  func.func @transform_4(%arg0: i32) -> (i32, i32) {
    %c0_i32 = arith.constant 0 : i32
    %c0_i32_0 = arith.constant 0 : i32
    return %arg0, %c0_i32 : i32, i32
  }
}

</mosaic_0001>

<llo_original>
// kernel: tpu_custom_call.1
$region0: #{tpu_custom_call.1}
  #allocation0 [shape = 'u32[]', space=smem, size = 0x4, offset = 0x4, fixed_abs, tag = 'smem constant byte address 0x4 - core index']
  #allocation1 [shape = 'u32[72,128]{1,0:T(1,128)}', space=vmem, size = 0x9000, scoped, tag = 'internal scratch']
  %s0 = inlined_call_operand.vmem [shape: s32[32,1], index: 0, kind: input, shape index: {}]
  %s1 = inlined_call_operand.vmem [shape: f32[30,32], index: 1, kind: input, shape index: {}]
  %s2 = inlined_call_operand.hbm [shape: f32[32,128], index: 2, kind: input, shape index: {}]
  %s3 = inlined_call_operand.vmem [shape: f32[1,128], index: 3, kind: input, shape index: {}]
  %s4 = inlined_call_operand.hbm [shape: f32[32,128], index: 4, kind: output, shape index: {}]
  %s5 = sld [smem:[#allocation0]]
  $region53: #{tpu_custom_call.1} parent=0
    _
  %s7 = ssub.s32 1, %s5
  %s8 = scalar_select 0, %s7, %s5
  $region1: #{tpu_custom_call.1} parent=0
    #allocation2 [shape = 'u8[16384]{0}', space=vmem, size = 0x4000, scoped, tag = 'input window, operand 2, single buffered']
    #allocation3 [shape = 's32[2]{0}', space=sflag, size = 0x8, scoped, tag = 'scoped memory for tpu_custom_call.1']
    #allocation4 [shape = 's32[2]{0}', space=sflag, size = 0x8, scoped, tag = 'scoped memory for tpu_custom_call.1']
    #allocation5 [shape = 'u8[16384]{0}', space=vmem, size = 0x4000, scoped, tag = 'output window, operand 0']
    %9 = vsyncpa [#allocation3], 0
    %10 = vsyncpa [#allocation4], 0
    %s11 = scalar_lea.sflag [#allocation4], 1
    %12 = vsyncpa %s11, 0
    loop: start=0, step=1, limit=4
    $region2: #{tpu_custom_call.1} parent=1 // loop_pre_header
      _
    $region3: #{tpu_custom_call.1} parent=1 // loop_header
      %s14 = sphi 0, %s18
      %p15 = scmp.ge.s32.totalorder %s14, 4
      %s24 = sphi 0, %s26
      %s27 = sphi 0, %s24
      %s28 = sphi 0, %s27
      %s44 = sphi 0, %s28
      %s48 = sphi 0, %s48
      %s50 = sphi 0, %s48
      %s51 = sphi 0, %s50
      %s65 = sphi 0, %s51
      %s69 = sphi 0, %s69
      %s71 = sphi 0, %s69
      %s72 = sphi 0, %s71
      %s86 = sphi 0, %s72
      %s90 = sphi 0, %s90
      %s92 = sphi 0, %s90
      %s93 = sphi 0, %s92
      %s107 = sphi 0, %s93
      %s113 = sphi 0, %s115
      %s116 = sphi 0, %s113
      %s117 = sphi 0, %s116
      %s133 = sphi 0, %s117
    $region4: #{tpu_custom_call.1} parent=1 // loop_header_branch
      %17 = sbr.rel (%p15) target = $region8
    $region5: #{tpu_custom_call.1} parent=1 // loop_body
      %s19 = ssub.s32 %s14, 1
      %s20 = ssub.s32 %s14, 2
      %s21 = sadd.s32 %s14, 1
      %s22 = ssub.s32 %s14, %s21
      %p23 = scmp.eq.s32.totalorder %s22, 0
      %s25 = sadd.s32 %s24, 1
      %s26 = scalar_select %p23, %s24, %s25
      %p29 = pneg %p23
      %p30 = scmp.eq.s32.totalorder %s14, 1
      %p31 = por %p29, %p30
      %p32 = scmp.ne.s32.totalorder %s24, %s27
      %p33 = scmp.eq.s32.totalorder %s14, 0
      %p34 = por %p32, %p33
      %p35 = scmp.ne.s32.totalorder %s24, %s27
      %p36 = scmp.eq.s32.totalorder %s19, 1
      %p37 = por %p35, %p36
      %p38 = scmp.ne.s32.totalorder %s27, %s28
      %p39 = scmp.eq.s32.totalorder %s19, 0
      %p40 = por %p38, %p39
      %p41 = scmp.ne.s32.totalorder %s27, %s28
      %p42 = scmp.eq.s32.totalorder %s20, 1
      %p43 = por %p41, %p42
      %p45 = scmp.ne.s32.totalorder %s28, %s44
      %p46 = scmp.eq.s32.totalorder %s20, 0
      %p47 = por %p45, %p46
      %s49 = sadd.s32 %s48, 1
      %p52 = scmp.eq.s32.totalorder %s14, 1
      %p53 = scmp.ne.s32.totalorder %s48, %s50
      %p54 = scmp.eq.s32.totalorder %s14, 0
      %p55 = por %p53, %p54
      %p56 = scmp.ne.s32.totalorder %s48, %s50
      %p57 = scmp.eq.s32.totalorder %s19, 1
      %p58 = por %p56, %p57
      %p59 = scmp.ne.s32.totalorder %s50, %s51
      %p60 = scmp.eq.s32.totalorder %s19, 0
      %p61 = por %p59, %p60
      %p62 = scmp.ne.s32.totalorder %s50, %s51
      %p63 = scmp.eq.s32.totalorder %s20, 1
      %p64 = por %p62, %p63
      %p66 = scmp.ne.s32.totalorder %s51, %s65
      %p67 = scmp.eq.s32.totalorder %s20, 0
      %p68 = por %p66, %p67
      %s70 = sadd.s32 %s69, 1
      %p73 = scmp.eq.s32.totalorder %s14, 1
      %p74 = scmp.ne.s32.totalorder %s69, %s71
      %p75 = scmp.eq.s32.totalorder %s14, 0
      %p76 = por %p74, %p75
      %p77 = scmp.ne.s32.totalorder %s69, %s71
      %p78 = scmp.eq.s32.totalorder %s19, 1
      %p79 = por %p77, %p78
      %p80 = scmp.ne.s32.totalorder %s71, %s72
      %p81 = scmp.eq.s32.totalorder %s19, 0
      %p82 = por %p80, %p81
      %p83 = scmp.ne.s32.totalorder %s71, %s72
      %p84 = scmp.eq.s32.totalorder %s20, 1
      %p85 = por %p83, %p84
      %p87 = scmp.ne.s32.totalorder %s72, %s86
      %p88 = scmp.eq.s32.totalorder %s20, 0
      %p89 = por %p87, %p88
      %s91 = sadd.s32 %s90, 1
      %p94 = scmp.eq.s32.totalorder %s14, 1
      %p95 = scmp.ne.s32.totalorder %s90, %s92
      %p96 = scmp.eq.s32.totalorder %s14, 0
      %p97 = por %p95, %p96
      %p98 = scmp.ne.s32.totalorder %s90, %s92
      %p99 = scmp.eq.s32.totalorder %s19, 1
      %p100 = por %p98, %p99
      %p101 = scmp.ne.s32.totalorder %s92, %s93
      %p102 = scmp.eq.s32.totalorder %s19, 0
      %p103 = por %p101, %p102
      %p104 = scmp.ne.s32.totalorder %s92, %s93
      %p105 = scmp.eq.s32.totalorder %s20, 1
      %p106 = por %p104, %p105
      %p108 = scmp.ne.s32.totalorder %s93, %s107
      %p109 = scmp.eq.s32.totalorder %s20, 0
      %p110 = por %p108, %p109
      %s111 = ssub.s32 %s14, %s21
      %p112 = scmp.eq.s32.totalorder %s111, 0
      %s114 = sadd.s32 %s113, 1
      %s115 = scalar_select %p112, %s113, %s114
      %p118 = pneg %p112
      %p119 = scmp.eq.s32.totalorder %s14, 1
      %p120 = por %p118, %p119
      %p121 = scmp.ne.s32.totalorder %s113, %s116
      %p122 = scmp.eq.s32.totalorder %s14, 0
      %p123 = por %p121, %p122
      %p124 = scmp.ne.s32.totalorder %s113, %s116
      %p125 = scmp.eq.s32.totalorder %s19, 1
      %p126 = por %p124, %p125
      %p127 = scmp.ne.s32.totalorder %s116, %s117
      %p128 = scmp.eq.s32.totalorder %s19, 0
      %p129 = por %p127, %p128
      %p130 = scmp.ne.s32.totalorder %s116, %s117
      %p131 = scmp.eq.s32.totalorder %s20, 1
      %p132 = por %p130, %p131
      %p134 = scmp.ne.s32.totalorder %s117, %s133
      %p135 = scmp.eq.s32.totalorder %s20, 0
      %p136 = por %p134, %p135
      %p137 = scmp.le.s32.totalorder 1, %s14
      %p138 = scmp.lt.s32.totalorder %s14, 3
      %p139 = pnand %p137, %p138
      %p140 = pneg %p139
      // Predicated region
      $region9: #{tpu_custom_call.1} parent=5 // pred_check
        _
      $region10: #{tpu_custom_call.1} parent=5 // pred_check_branch
        %142 = sbr.rel (%p139) target = $region12
      $region11: #{tpu_custom_call.1} parent=5 // pred_region
        %s143 = ssub.s32 %s14, 1
        // Predicated region
        $region13: #{tpu_custom_call.1} parent=11 // pred_check
          %p144 = pneg %p61
        $region14: #{tpu_custom_call.1} parent=11 // pred_check_branch
          %146 = sbr.rel (%p144) target = $region16
        $region15: #{tpu_custom_call.1} parent=11 // pred_region
          _
        $region16: #{tpu_custom_call.1} parent=11 // pred_fallthru
          _
        // Predicated region
        $region17: #{tpu_custom_call.1} parent=11 // pred_check
          %p147 = pneg %p82
        $region18: #{tpu_custom_call.1} parent=11 // pred_check_branch
          %149 = sbr.rel (%p147) target = $region20
        $region19: #{tpu_custom_call.1} parent=11 // pred_region
          %151 = vsyncadd [#allocation3], 0
          %s152 = sshll.u32 %s2, 4
          %s153 = int_to_ptr.hbm [resolvable:$true] %s152
          %s154 = sshll.u32 [#allocation2], 4
          %s155 = int_to_ptr.vmem [resolvable:$true] %s154
          %160 = dma.hbm_to_vmem [thread:$0]  %s153, 512, %s155, [#allocation3], 128, 128, 8
        $region20: #{tpu_custom_call.1} parent=11 // pred_fallthru
          _
        // Predicated region
        $region21: #{tpu_custom_call.1} parent=11 // pred_check
          %p161 = pneg %p103
        $region22: #{tpu_custom_call.1} parent=11 // pred_check_branch
          %163 = sbr.rel (%p161) target = $region24
        $region23: #{tpu_custom_call.1} parent=11 // pred_region
          _
        $region24: #{tpu_custom_call.1} parent=11 // pred_fallthru
          _
      $region12: #{tpu_custom_call.1} parent=5 // pred_fallthru
        _
      %p164 = scmp.lt.s32.totalorder %s14, 2
      // Predicated region
      $region25: #{tpu_custom_call.1} parent=5 // pred_check
        %p165 = pneg %p164
      $region26: #{tpu_custom_call.1} parent=5 // pred_check_branch
        %167 = sbr.rel (%p165) target = $region28
      $region27: #{tpu_custom_call.1} parent=5 // pred_region
        // Predicated region
        $region29: #{tpu_custom_call.1} parent=27 // pred_check
          %p168 = pneg %p34
        $region30: #{tpu_custom_call.1} parent=27 // pred_check_branch
          %170 = sbr.rel (%p168) target = $region32
        $region31: #{tpu_custom_call.1} parent=27 // pred_region
          %s171 = smul.u32 2, %s14
          %p172 = scmp.lt.s32.totalorder %s171, 3
          %s173 = scalar_select %p172, %s171, 3
          %s174 = smul.addr %s173, 8
          %s175 = scalar_lea.vmem %s0, %s174
          %s176 = smul.u32 2, %s14
        $region32: #{tpu_custom_call.1} parent=27 // pred_fallthru
          _
      $region28: #{tpu_custom_call.1} parent=5 // pred_fallthru
        _
      %p177 = scmp.le.s32.totalorder 1, %s14
      %p178 = scmp.lt.s32.totalorder %s14, 3
      %p179 = pnand %p177, %p178
      %p180 = pneg %p179
      // Predicated region
      $region33: #{tpu_custom_call.1} parent=5 // pred_check
        _
      $region34: #{tpu_custom_call.1} parent=5 // pred_check_branch
        %182 = sbr.rel (%p179) target = $region36
      $region35: #{tpu_custom_call.1} parent=5 // pred_region
        %s183 = ssub.s32 %s14, 1
        // Predicated region
        $region37: #{tpu_custom_call.1} parent=35 // pred_check
          %p184 = pneg %p82
        $region38: #{tpu_custom_call.1} parent=35 // pred_check_branch
          %186 = sbr.rel (%p184) target = $region40
        $region39: #{tpu_custom_call.1} parent=35 // pred_region
          %188 = dma.done [#allocation3], 512
        $region40: #{tpu_custom_call.1} parent=35 // pred_fallthru
          _
        %s189 = smul.u32 2, %s19
        %p190 = scmp.lt.s32.totalorder %s189, 3
        %s191 = scalar_select %p190, %s189, 3
        %s192 = smul.addr %s191, 8
        %s193 = scalar_lea.vmem %s0, %s192
        %p194 = pneg %p40
        %p195 = pneg %p37
        %p196 = pneg %p61
        %p197 = pneg %p58
        %p198 = pneg %p82
        %p199 = pneg %p79
        %p200 = pneg %p103
        %p201 = pneg %p100
        %p202 = pneg %p129
        %p203 = pneg %p126
        %s204 = sand.u32 %s116, 1
        %s205 = scalar_lea.sflag [#allocation4], %s204
        %s206 = sand.u32 %s116, 1
        %s207 = smul.addr %s206, 16
        %s208 = scalar_lea.vmem [#allocation5], %s207
        %s209 = smul.u32 2, %s19
        %p210 = scmp.lt.s32.totalorder %s209, 3
        %s211 = scalar_select %p210, %s209, 3
        %s212 = smul.addr %s211, 8
        %s213 = scalar_lea.vmem %s0, %s212
        %s214 = smul.u32 2, %s19
        %s215 = smul.u32 2, %s19
        %v216 = vld [vmem:[%s1] sm:$0xff]
        %v217 = vld [vmem:[%s1 + $0x8] sm:$0xff]
        %v218 = vld [vmem:[%s1 + $0x10] sm:$0xff]
        %v219 = vld [vmem:[%s1 + $0x18] sm:$0x3f]
        %v220 = vld [vmem:[#allocation2] sm:$0xff]
        %v221 = vld [vmem:[#allocation2 + $0x8] sm:$0xff]
        %v222 = vld [vmem:[#allocation2 + $0x10] sm:$0xff]
        %v223 = vld [vmem:[#allocation2 + $0x18] sm:$0xff]
        %v224 = vld [vmem:[%s3] sm:$0x1]
        %v226 = vperm.slane %v224, 0
        %vm228 = vcmask 261120
        %v230 = vsel %vm228, %v216, 0
        %v233 = vsel %vm228, %v217, 0
        %v236 = vsel %vm228, %v218, 0
        %v239 = vsel %vm228, %v219, 0
        %241 = vmatpush.msra.mxu0 0.0
        %242 = vmatpush.msra.mxu0 0.0
        %243 = vmatpush.msra.mxu0 0.0
        %244 = vmatpush.msra.mxu0 0.0
        %245 = vmatpush.msra.mxu0 0.0
        %246 = vmatpush.msra.mxu0 0.0
        %247 = vmatpush.msra.mxu0 0.0
        %248 = vmatpush.msra.mxu0 0.0
        %249 = vmatpush.msra.mxu0 0.0
        %250 = vmatpush.msra.mxu0 0.0
        %251 = vmatpush.msra.mxu0 0.0
        %252 = vmatpush.msra.mxu0 0.0
        %v253 = vand.u32 %v223, 4294901760
        %254 = vmatpush.msra.mxu0 %v253
        %v255 = vand.u32 %v222, 4294901760
        %256 = vmatpush.msra.mxu0 %v255
        %v257 = vand.u32 %v221, 4294901760
        %258 = vmatpush.msra.mxu0 %v257
        %v259 = vand.u32 %v220, 4294901760
        %260 = vmatpush.msra.mxu0 %v259
        %v261 = vand.u32 %v230, 4294901760
        %v262 = vsub.f32 %v230, %v261
        %v263 = vand.u32 %v262, 4294901760
        %v264 = vsub.f32 %v262, %v263
        %v265 = vand.u32 %v264, 4294901760
        %266 = vmatmul.f32.gmra.mxu0 %v265
        %v267 = vpop.f32.mrf.mxu0
        %v268 = vadd.f32 %v226, %v267
        %v269 = vand.u32 %v233, 4294901760
        %v270 = vsub.f32 %v233, %v269
        %v271 = vand.u32 %v270, 4294901760
        %v272 = vsub.f32 %v270, %v271
        %v273 = vand.u32 %v272, 4294901760
        %274 = vmatmul.f32.gmra.mxu0 %v273
        %v275 = vpop.f32.mrf.mxu0
        %v276 = vadd.f32 %v226, %v275
        %v277 = vand.u32 %v236, 4294901760
        %v278 = vsub.f32 %v236, %v277
        %v279 = vand.u32 %v278, 4294901760
        %v280 = vsub.f32 %v278, %v279
        %v281 = vand.u32 %v280, 4294901760
        %282 = vmatmul.f32.gmra.mxu0 %v281
        %v283 = vpop.f32.mrf.mxu0
        %v284 = vadd.f32 %v226, %v283
        %v285 = vand.u32 %v239, 4294901760
        %v286 = vsub.f32 %v239, %v285
        %v287 = vand.u32 %v286, 4294901760
        %v288 = vsub.f32 %v286, %v287
        %v289 = vand.u32 %v288, 4294901760
        %290 = vmatmul.f32.gmra.mxu0 %v289
        %v291 = vpop.f32.mrf.mxu0
        %v292 = vadd.f32 %v226, %v291
        %293 = vdwg.mxu0
        %294 = vmatpush.msra.mxu0 0.0
        %295 = vmatpush.msra.mxu0 0.0
        %296 = vmatpush.msra.mxu0 0.0
        %297 = vmatpush.msra.mxu0 0.0
        %298 = vmatpush.msra.mxu0 0.0
        %299 = vmatpush.msra.mxu0 0.0
        %300 = vmatpush.msra.mxu0 0.0
        %301 = vmatpush.msra.mxu0 0.0
        %302 = vmatpush.msra.mxu0 0.0
        %303 = vmatpush.msra.mxu0 0.0
        %304 = vmatpush.msra.mxu0 0.0
        %305 = vmatpush.msra.mxu0 0.0
        %v306 = vand.u32 %v223, 4294901760
        %v307 = vsub.f32 %v223, %v306
        %v308 = vand.u32 %v307, 4294901760
        %v309 = vsub.f32 %v307, %v308
        %v310 = vand.u32 %v309, 4294901760
        %311 = vmatpush.msra.mxu0 %v310
        %v312 = vand.u32 %v222, 4294901760
        %v313 = vsub.f32 %v222, %v312
        %v314 = vand.u32 %v313, 4294901760
        %v315 = vsub.f32 %v313, %v314
        %v316 = vand.u32 %v315, 4294901760
        %317 = vmatpush.msra.mxu0 %v316
        %v318 = vand.u32 %v221, 4294901760
        %v319 = vsub.f32 %v221, %v318
        %v320 = vand.u32 %v319, 4294901760
        %v321 = vsub.f32 %v319, %v320
        %v322 = vand.u32 %v321, 4294901760
        %323 = vmatpush.msra.mxu0 %v322
        %v324 = vand.u32 %v220, 4294901760
        %v325 = vsub.f32 %v220, %v324
        %v326 = vand.u32 %v325, 4294901760
        %v327 = vsub.f32 %v325, %v326
        %v328 = vand.u32 %v327, 4294901760
        %329 = vmatpush.msra.mxu0 %v328
        %v330 = vand.u32 %v230, 4294901760
        %331 = vmatmul.f32.gmra.mxu0 %v330
        %v332 = vpop.f32.mrf.mxu0
        %v333 = vadd.f32 %v268, %v332
        %v334 = vand.u32 %v233, 4294901760
        %335 = vmatmul.f32.gmra.mxu0 %v334
        %v336 = vpop.f32.mrf.mxu0
        %v337 = vadd.f32 %v276, %v336
        %v338 = vand.u32 %v236, 4294901760
        %339 = vmatmul.f32.gmra.mxu0 %v338
        %v340 = vpop.f32.mrf.mxu0
        %v341 = vadd.f32 %v284, %v340
        %v342 = vand.u32 %v239, 4294901760
        %343 = vmatmul.f32.gmra.mxu0 %v342
        %v344 = vpop.f32.mrf.mxu0
        %v345 = vadd.f32 %v292, %v344
        %346 = vdwg.mxu0
        %347 = vmatpush.msra.mxu0 0.0
        %348 = vmatpush.msra.mxu0 0.0
        %349 = vmatpush.msra.mxu0 0.0
        %350 = vmatpush.msra.mxu0 0.0
        %351 = vmatpush.msra.mxu0 0.0
        %352 = vmatpush.msra.mxu0 0.0
        %353 = vmatpush.msra.mxu0 0.0
        %354 = vmatpush.msra.mxu0 0.0
        %355 = vmatpush.msra.mxu0 0.0
        %356 = vmatpush.msra.mxu0 0.0
        %357 = vmatpush.msra.mxu0 0.0
        %358 = vmatpush.msra.mxu0 0.0
        %v359 = vand.u32 %v223, 4294901760
        %v360 = vsub.f32 %v223, %v359
        %361 = vmatpush.msra.mxu0 %v360
        %v362 = vand.u32 %v222, 4294901760
        %v363 = vsub.f32 %v222, %v362
        %364 = vmatpush.msra.mxu0 %v363
        %v365 = vand.u32 %v221, 4294901760
        %v366 = vsub.f32 %v221, %v365
        %367 = vmatpush.msra.mxu0 %v366
        %v368 = vand.u32 %v220, 4294901760
        %v369 = vsub.f32 %v220, %v368
        %370 = vmatpush.msra.mxu0 %v369
        %v371 = vand.u32 %v230, 4294901760
        %v372 = vsub.f32 %v230, %v371
        %373 = vmatmul.f32.gmra.mxu0 %v372
        %v374 = vpop.f32.mrf.mxu0
        %v375 = vadd.f32 %v333, %v374
        %v376 = vand.u32 %v233, 4294901760
        %v377 = vsub.f32 %v233, %v376
        %378 = vmatmul.f32.gmra.mxu0 %v377
        %v379 = vpop.f32.mrf.mxu0
        %v380 = vadd.f32 %v337, %v379
        %v381 = vand.u32 %v236, 4294901760
        %v382 = vsub.f32 %v236, %v381
        %383 = vmatmul.f32.gmra.mxu0 %v382
        %v384 = vpop.f32.mrf.mxu0
        %v385 = vadd.f32 %v341, %v384
        %v386 = vand.u32 %v239, 4294901760
        %v387 = vsub.f32 %v239, %v386
        %388 = vmatmul.f32.gmra.mxu0 %v387
        %v389 = vpop.f32.mrf.mxu0
        %v390 = vadd.f32 %v345, %v389
        %391 = vdwg.mxu0
        %392 = vmatpush.msra.mxu0 0.0
        %393 = vmatpush.msra.mxu0 0.0
        %394 = vmatpush.msra.mxu0 0.0
        %395 = vmatpush.msra.mxu0 0.0
        %396 = vmatpush.msra.mxu0 0.0
        %397 = vmatpush.msra.mxu0 0.0
        %398 = vmatpush.msra.mxu0 0.0
        %399 = vmatpush.msra.mxu0 0.0
        %400 = vmatpush.msra.mxu0 0.0
        %401 = vmatpush.msra.mxu0 0.0
        %402 = vmatpush.msra.mxu0 0.0
        %403 = vmatpush.msra.mxu0 0.0
        %v404 = vand.u32 %v223, 4294901760
        %405 = vmatpush.msra.mxu0 %v404
        %v406 = vand.u32 %v222, 4294901760
        %407 = vmatpush.msra.mxu0 %v406
        %v408 = vand.u32 %v221, 4294901760
        %409 = vmatpush.msra.mxu0 %v408
        %v410 = vand.u32 %v220, 4294901760
        %411 = vmatpush.msra.mxu0 %v410
        %v412 = vand.u32 %v230, 4294901760
        %v413 = vsub.f32 %v230, %v412
        %v414 = vand.u32 %v413, 4294901760
        %415 = vmatmul.f32.gmra.mxu0 %v414
        %v416 = vpop.f32.mrf.mxu0
        %v417 = vadd.f32 %v375, %v416
        %v418 = vand.u32 %v233, 4294901760
        %v419 = vsub.f32 %v233, %v418
        %v420 = vand.u32 %v419, 4294901760
        %421 = vmatmul.f32.gmra.mxu0 %v420
        %v422 = vpop.f32.mrf.mxu0
        %v423 = vadd.f32 %v380, %v422
        %v424 = vand.u32 %v236, 4294901760
        %v425 = vsub.f32 %v236, %v424
        %v426 = vand.u32 %v425, 4294901760
        %427 = vmatmul.f32.gmra.mxu0 %v426
        %v428 = vpop.f32.mrf.mxu0
        %v429 = vadd.f32 %v385, %v428
        %v430 = vand.u32 %v239, 4294901760
        %v431 = vsub.f32 %v239, %v430
        %v432 = vand.u32 %v431, 4294901760
        %433 = vmatmul.f32.gmra.mxu0 %v432
        %v434 = vpop.f32.mrf.mxu0
        %v435 = vadd.f32 %v390, %v434
        %436 = vdwg.mxu0
        %437 = vmatpush.msra.mxu0 0.0
        %438 = vmatpush.msra.mxu0 0.0
        %439 = vmatpush.msra.mxu0 0.0
        %440 = vmatpush.msra.mxu0 0.0
        %441 = vmatpush.msra.mxu0 0.0
        %442 = vmatpush.msra.mxu0 0.0
        %443 = vmatpush.msra.mxu0 0.0
        %444 = vmatpush.msra.mxu0 0.0
        %445 = vmatpush.msra.mxu0 0.0
        %446 = vmatpush.msra.mxu0 0.0
        %447 = vmatpush.msra.mxu0 0.0
        %448 = vmatpush.msra.mxu0 0.0
        %v449 = vand.u32 %v223, 4294901760
        %v450 = vsub.f32 %v223, %v449
        %v451 = vand.u32 %v450, 4294901760
        %452 = vmatpush.msra.mxu0 %v451
        %v453 = vand.u32 %v222, 4294901760
        %v454 = vsub.f32 %v222, %v453
        %v455 = vand.u32 %v454, 4294901760
        %456 = vmatpush.msra.mxu0 %v455
        %v457 = vand.u32 %v221, 4294901760
        %v458 = vsub.f32 %v221, %v457
        %v459 = vand.u32 %v458, 4294901760
        %460 = vmatpush.msra.mxu0 %v459
        %v461 = vand.u32 %v220, 4294901760
        %v462 = vsub.f32 %v220, %v461
        %v463 = vand.u32 %v462, 4294901760
        %464 = vmatpush.msra.mxu0 %v463
        %v465 = vand.u32 %v230, 4294901760
        %466 = vmatmul.f32.gmra.mxu0 %v465
        %v467 = vpop.f32.mrf.mxu0
        %v468 = vadd.f32 %v417, %v467
        %v469 = vand.u32 %v233, 4294901760
        %470 = vmatmul.f32.gmra.mxu0 %v469
        %v471 = vpop.f32.mrf.mxu0
        %v472 = vadd.f32 %v423, %v471
        %v473 = vand.u32 %v236, 4294901760
        %474 = vmatmul.f32.gmra.mxu0 %v473
        %v475 = vpop.f32.mrf.mxu0
        %v476 = vadd.f32 %v429, %v475
        %v477 = vand.u32 %v239, 4294901760
        %478 = vmatmul.f32.gmra.mxu0 %v477
        %v479 = vpop.f32.mrf.mxu0
        %v480 = vadd.f32 %v435, %v479
        %481 = vdwg.mxu0
        %482 = vmatpush.msra.mxu0 0.0
        %483 = vmatpush.msra.mxu0 0.0
        %484 = vmatpush.msra.mxu0 0.0
        %485 = vmatpush.msra.mxu0 0.0
        %486 = vmatpush.msra.mxu0 0.0
        %487 = vmatpush.msra.mxu0 0.0
        %488 = vmatpush.msra.mxu0 0.0
        %489 = vmatpush.msra.mxu0 0.0
        %490 = vmatpush.msra.mxu0 0.0
        %491 = vmatpush.msra.mxu0 0.0
        %492 = vmatpush.msra.mxu0 0.0
        %493 = vmatpush.msra.mxu0 0.0
        %v494 = vand.u32 %v223, 4294901760
        %495 = vmatpush.msra.mxu0 %v494
        %v496 = vand.u32 %v222, 4294901760
        %497 = vmatpush.msra.mxu0 %v496
        %v498 = vand.u32 %v221, 4294901760
        %499 = vmatpush.msra.mxu0 %v498
        %v500 = vand.u32 %v220, 4294901760
        %501 = vmatpush.msra.mxu0 %v500
        %v502 = vand.u32 %v230, 4294901760
        %503 = vmatmul.f32.gmra.mxu0 %v502
        %v504 = vpop.f32.mrf.mxu0
        %v505 = vadd.f32 %v468, %v504
        %v506 = vand.u32 %v233, 4294901760
        %507 = vmatmul.f32.gmra.mxu0 %v506
        %v508 = vpop.f32.mrf.mxu0
        %v509 = vadd.f32 %v472, %v508
        %v510 = vand.u32 %v236, 4294901760
        %511 = vmatmul.f32.gmra.mxu0 %v510
        %v512 = vpop.f32.mrf.mxu0
        %v513 = vadd.f32 %v476, %v512
        %v514 = vand.u32 %v239, 4294901760
        %515 = vmatmul.f32.gmra.mxu0 %v514
        %v516 = vpop.f32.mrf.mxu0
        %v517 = vadd.f32 %v480, %v516
        %518 = vdwg.mxu0
        %v519 = vld [vmem:[%s213] sm:$0xff]
        %v520 = vld [vmem:[%s213 + $0x8] sm:$0xff]
        %vm521 = vcmp.gt.s32.totalorder %v519, 0
        %v522 = vsel %vm521, %v519, 0
        %vm523 = vcmp.gt.s32.totalorder %v520, 0
        %v524 = vsel %vm523, %v520, 0
        %vm525 = vcmp.lt.s32.totalorder %v522, 29
        %v526 = vsel %vm525, %v522, 29
        %vm527 = vcmp.lt.s32.totalorder %v524, 29
        %v528 = vsel %vm527, %v524, 29
        %v529 = vlaneseq
        %v530 = vand.u32 %v529, 127
        %531 = vset.pattern.permute.xlu0 0
        %532 = vperm.xlu0 %531, %v526
        %v533 = vpop.permute.xlu0 %532
        %534 = vset.pattern.permute.xlu0 0
        %535 = vperm.xlu0 %534, %v528
        %v536 = vpop.permute.xlu0 %535
        %vm537 = vcmp.eq.s32.totalorder %v533, %v530
        %vm538 = vcmp.eq.s32.totalorder %v536, %v530
        %v539 = vsel %vm537, 1, 0
        %v540 = vsel %vm538, 1, 0
        %v541 = vcvt.s32.f32 %v539
        %v542 = vcvt.s32.f32 %v540
        %vm543 = vcmask 244736
        %v545 = vsel %vm543, %v541, 0
        %v548 = vsel %vm543, %v542, 0
        %vm550 = vcmask 1045504
        %v552 = vsel %vm550, %v517, 0
        %554 = vmatpush.msra.mxu0 0.0
        %555 = vmatpush.msra.mxu0 0.0
        %556 = vmatpush.msra.mxu0 0.0
        %557 = vmatpush.msra.mxu0 0.0
        %558 = vmatpush.msra.mxu0 0.0
        %559 = vmatpush.msra.mxu0 0.0
        %560 = vmatpush.msra.mxu0 0.0
        %561 = vmatpush.msra.mxu0 0.0
        %562 = vmatpush.msra.mxu0 0.0
        %563 = vmatpush.msra.mxu0 0.0
        %564 = vmatpush.msra.mxu0 0.0
        %565 = vmatpush.msra.mxu0 0.0
        %v566 = vand.u32 %v552, 4294901760
        %567 = vmatpush.msra.mxu0 %v566
        %v568 = vand.u32 %v513, 4294901760
        %569 = vmatpush.msra.mxu0 %v568
        %v570 = vand.u32 %v509, 4294901760
        %571 = vmatpush.msra.mxu0 %v570
        %v572 = vand.u32 %v505, 4294901760
        %573 = vmatpush.msra.mxu0 %v572
        %v574 = vand.u32 %v545, 4294901760
        %v575 = vsub.f32 %v545, %v574
        %v576 = vand.u32 %v575, 4294901760
        %v577 = vsub.f32 %v575, %v576
        %v578 = vand.u32 %v577, 4294901760
        %579 = vmatmul.f32.gmra.mxu0 %v578
        %v580 = vpop.f32.mrf.mxu0
        %v581 = vadd.f32 0.0, %v580
        %v582 = vand.u32 %v548, 4294901760
        %v583 = vsub.f32 %v548, %v582
        %v584 = vand.u32 %v583, 4294901760
        %v585 = vsub.f32 %v583, %v584
        %v586 = vand.u32 %v585, 4294901760
        %587 = vmatmul.f32.gmra.mxu0 %v586
        %v588 = vpop.f32.mrf.mxu0
        %v589 = vadd.f32 0.0, %v588
        %590 = vdwg.mxu0
        %591 = vmatpush.msra.mxu0 0.0
        %592 = vmatpush.msra.mxu0 0.0
        %593 = vmatpush.msra.mxu0 0.0
        %594 = vmatpush.msra.mxu0 0.0
        %595 = vmatpush.msra.mxu0 0.0
        %596 = vmatpush.msra.mxu0 0.0
        %597 = vmatpush.msra.mxu0 0.0
        %598 = vmatpush.msra.mxu0 0.0
        %599 = vmatpush.msra.mxu0 0.0
        %600 = vmatpush.msra.mxu0 0.0
        %601 = vmatpush.msra.mxu0 0.0
        %602 = vmatpush.msra.mxu0 0.0
        %v603 = vand.u32 %v552, 4294901760
        %v604 = vsub.f32 %v552, %v603
        %v605 = vand.u32 %v604, 4294901760
        %v606 = vsub.f32 %v604, %v605
        %v607 = vand.u32 %v606, 4294901760
        %608 = vmatpush.msra.mxu0 %v607
        %v609 = vand.u32 %v513, 4294901760
        %v610 = vsub.f32 %v513, %v609
        %v611 = vand.u32 %v610, 4294901760
        %v612 = vsub.f32 %v610, %v611
        %v613 = vand.u32 %v612, 4294901760
        %614 = vmatpush.msra.mxu0 %v613
        %v615 = vand.u32 %v509, 4294901760
        %v616 = vsub.f32 %v509, %v615
        %v617 = vand.u32 %v616, 4294901760
        %v618 = vsub.f32 %v616, %v617
        %v619 = vand.u32 %v618, 4294901760
        %620 = vmatpush.msra.mxu0 %v619
        %v621 = vand.u32 %v505, 4294901760
        %v622 = vsub.f32 %v505, %v621
        %v623 = vand.u32 %v622, 4294901760
        %v624 = vsub.f32 %v622, %v623
        %v625 = vand.u32 %v624, 4294901760
        %626 = vmatpush.msra.mxu0 %v625
        %v627 = vand.u32 %v545, 4294901760
        %628 = vmatmul.f32.gmra.mxu0 %v627
        %v629 = vpop.f32.mrf.mxu0
        %v630 = vadd.f32 %v581, %v629
        %v631 = vand.u32 %v548, 4294901760
        %632 = vmatmul.f32.gmra.mxu0 %v631
        %v633 = vpop.f32.mrf.mxu0
        %v634 = vadd.f32 %v589, %v633
        %635 = vdwg.mxu0
        %636 = vmatpush.msra.mxu0 0.0
        %637 = vmatpush.msra.mxu0 0.0
        %638 = vmatpush.msra.mxu0 0.0
        %639 = vmatpush.msra.mxu0 0.0
        %640 = vmatpush.msra.mxu0 0.0
        %641 = vmatpush.msra.mxu0 0.0
        %642 = vmatpush.msra.mxu0 0.0
        %643 = vmatpush.msra.mxu0 0.0
        %644 = vmatpush.msra.mxu0 0.0
        %645 = vmatpush.msra.mxu0 0.0
        %646 = vmatpush.msra.mxu0 0.0
        %647 = vmatpush.msra.mxu0 0.0
        %v648 = vand.u32 %v552, 4294901760
        %v649 = vsub.f32 %v552, %v648
        %650 = vmatpush.msra.mxu0 %v649
        %v651 = vand.u32 %v513, 4294901760
        %v652 = vsub.f32 %v513, %v651
        %653 = vmatpush.msra.mxu0 %v652
        %v654 = vand.u32 %v509, 4294901760
        %v655 = vsub.f32 %v509, %v654
        %656 = vmatpush.msra.mxu0 %v655
        %v657 = vand.u32 %v505, 4294901760
        %v658 = vsub.f32 %v505, %v657
        %659 = vmatpush.msra.mxu0 %v658
        %v660 = vand.u32 %v545, 4294901760
        %v661 = vsub.f32 %v545, %v660
        %662 = vmatmul.f32.gmra.mxu0 %v661
        %v663 = vpop.f32.mrf.mxu0
        %v664 = vadd.f32 %v630, %v663
        %v665 = vand.u32 %v548, 4294901760
        %v666 = vsub.f32 %v548, %v665
        %667 = vmatmul.f32.gmra.mxu0 %v666
        %v668 = vpop.f32.mrf.mxu0
        %v669 = vadd.f32 %v634, %v668
        %670 = vdwg.mxu0
        %671 = vmatpush.msra.mxu0 0.0
        %672 = vmatpush.msra.mxu0 0.0
        %673 = vmatpush.msra.mxu0 0.0
        %674 = vmatpush.msra.mxu0 0.0
        %675 = vmatpush.msra.mxu0 0.0
        %676 = vmatpush.msra.mxu0 0.0
        %677 = vmatpush.msra.mxu0 0.0
        %678 = vmatpush.msra.mxu0 0.0
        %679 = vmatpush.msra.mxu0 0.0
        %680 = vmatpush.msra.mxu0 0.0
        %681 = vmatpush.msra.mxu0 0.0
        %682 = vmatpush.msra.mxu0 0.0
        %v683 = vand.u32 %v552, 4294901760
        %684 = vmatpush.msra.mxu0 %v683
        %v685 = vand.u32 %v513, 4294901760
        %686 = vmatpush.msra.mxu0 %v685
        %v687 = vand.u32 %v509, 4294901760
        %688 = vmatpush.msra.mxu0 %v687
        %v689 = vand.u32 %v505, 4294901760
        %690 = vmatpush.msra.mxu0 %v689
        %v691 = vand.u32 %v545, 4294901760
        %v692 = vsub.f32 %v545, %v691
        %v693 = vand.u32 %v692, 4294901760
        %694 = vmatmul.f32.gmra.mxu0 %v693
        %v695 = vpop.f32.mrf.mxu0
        %v696 = vadd.f32 %v664, %v695
        %v697 = vand.u32 %v548, 4294901760
        %v698 = vsub.f32 %v548, %v697
        %v699 = vand.u32 %v698, 4294901760
        %700 = vmatmul.f32.gmra.mxu0 %v699
        %v701 = vpop.f32.mrf.mxu0
        %v702 = vadd.f32 %v669, %v701
        %703 = vdwg.mxu0
        %704 = vmatpush.msra.mxu0 0.0
        %705 = vmatpush.msra.mxu0 0.0
        %706 = vmatpush.msra.mxu0 0.0
        %707 = vmatpush.msra.mxu0 0.0
        %708 = vmatpush.msra.mxu0 0.0
        %709 = vmatpush.msra.mxu0 0.0
        %710 = vmatpush.msra.mxu0 0.0
        %711 = vmatpush.msra.mxu0 0.0
        %712 = vmatpush.msra.mxu0 0.0
        %713 = vmatpush.msra.mxu0 0.0
        %714 = vmatpush.msra.mxu0 0.0
        %715 = vmatpush.msra.mxu0 0.0
        %v716 = vand.u32 %v552, 4294901760
        %v717 = vsub.f32 %v552, %v716
        %v718 = vand.u32 %v717, 4294901760
        %719 = vmatpush.msra.mxu0 %v718
        %v720 = vand.u32 %v513, 4294901760
        %v721 = vsub.f32 %v513, %v720
        %v722 = vand.u32 %v721, 4294901760
        %723 = vmatpush.msra.mxu0 %v722
        %v724 = vand.u32 %v509, 4294901760
        %v725 = vsub.f32 %v509, %v724
        %v726 = vand.u32 %v725, 4294901760
        %727 = vmatpush.msra.mxu0 %v726
        %v728 = vand.u32 %v505, 4294901760
        %v729 = vsub.f32 %v505, %v728
        %v730 = vand.u32 %v729, 4294901760
        %731 = vmatpush.msra.mxu0 %v730
        %v732 = vand.u32 %v545, 4294901760
        %733 = vmatmul.f32.gmra.mxu0 %v732
        %v734 = vpop.f32.mrf.mxu0
        %v735 = vadd.f32 %v696, %v734
        %v736 = vand.u32 %v548, 4294901760
        %737 = vmatmul.f32.gmra.mxu0 %v736
        %v738 = vpop.f32.mrf.mxu0
        %v739 = vadd.f32 %v702, %v738
        %740 = vdwg.mxu0
        %741 = vmatpush.msra.mxu0 0.0
        %742 = vmatpush.msra.mxu0 0.0
        %743 = vmatpush.msra.mxu0 0.0
        %744 = vmatpush.msra.mxu0 0.0
        %745 = vmatpush.msra.mxu0 0.0
        %746 = vmatpush.msra.mxu0 0.0
        %747 = vmatpush.msra.mxu0 0.0
        %748 = vmatpush.msra.mxu0 0.0
        %749 = vmatpush.msra.mxu0 0.0
        %750 = vmatpush.msra.mxu0 0.0
        %751 = vmatpush.msra.mxu0 0.0
        %752 = vmatpush.msra.mxu0 0.0
        %v753 = vand.u32 %v552, 4294901760
        %754 = vmatpush.msra.mxu0 %v753
        %v755 = vand.u32 %v513, 4294901760
        %756 = vmatpush.msra.mxu0 %v755
        %v757 = vand.u32 %v509, 4294901760
        %758 = vmatpush.msra.mxu0 %v757
        %v759 = vand.u32 %v505, 4294901760
        %760 = vmatpush.msra.mxu0 %v759
        %v761 = vand.u32 %v545, 4294901760
        %762 = vmatmul.f32.gmra.mxu0 %v761
        %v763 = vpop.f32.mrf.mxu0
        %v764 = vadd.f32 %v735, %v763
        %v765 = vand.u32 %v548, 4294901760
        %766 = vmatmul.f32.gmra.mxu0 %v765
        %v767 = vpop.f32.mrf.mxu0
        %v768 = vadd.f32 %v739, %v767
        %769 = vdwg.mxu0
        %770 = vst [vmem:[%s208] sm:$0xff] %v764
        %771 = vst [vmem:[%s208 + $0x8] sm:$0xff] %v768
        %s772 = sand.u32 %s116, 1
        %s773 = scalar_lea.sflag [#allocation4], %s772
        %s774 = sand.u32 %s116, 1
        %s775 = smul.addr %s774, 16
        %s776 = scalar_lea.vmem [#allocation5], %s775
        // Predicated region
        $region41: #{tpu_custom_call.1} parent=35 // pred_check
          %p777 = pneg %p126
        $region42: #{tpu_custom_call.1} parent=35 // pred_check_branch
          %779 = sbr.rel (%p777) target = $region44
        $region43: #{tpu_custom_call.1} parent=35 // pred_region
          %s780 = smul.u32 2, %s19
          %782 = vsyncadd %s773, 0
          %s783 = smul.addr %s780, 8
          %s784 = scalar_lea.hbm %s4, %s783
          %s785 = sshll.u32 %s776, 4
          %s786 = int_to_ptr.vmem [resolvable:$true] %s785
          %s787 = sshll.u32 %s784, 4
          %s788 = int_to_ptr.hbm [resolvable:$true] %s787
          %793 = dma.vmem_to_hbm [thread:$0]  %s786, 256, %s788, %s773, 128, 128, 8
        $region44: #{tpu_custom_call.1} parent=35 // pred_fallthru
          _
      $region36: #{tpu_custom_call.1} parent=5 // pred_fallthru
        _
      %p794 = scmp.le.s32.totalorder 2, %s14
      // Predicated region
      $region45: #{tpu_custom_call.1} parent=5 // pred_check
        %p795 = pneg %p794
      $region46: #{tpu_custom_call.1} parent=5 // pred_check_branch
        %797 = sbr.rel (%p795) target = $region48
      $region47: #{tpu_custom_call.1} parent=5 // pred_region
        %s798 = ssub.s32 %s14, 2
        // Predicated region
        $region49: #{tpu_custom_call.1} parent=47 // pred_check
          %p799 = pneg %p132
        $region50: #{tpu_custom_call.1} parent=47 // pred_check_branch
          %801 = sbr.rel (%p799) target = $region52
        $region51: #{tpu_custom_call.1} parent=47 // pred_region
          %s802 = sand.u32 %s117, 1
          %s803 = scalar_lea.sflag [#allocation4], %s802
          %s804 = sand.u32 %s117, 1
          %s805 = smul.addr %s804, 16
          %s806 = scalar_lea.vmem [#allocation5], %s805
          %808 = dma.done %s803, 256
        $region52: #{tpu_custom_call.1} parent=47 // pred_fallthru
          _
      $region48: #{tpu_custom_call.1} parent=5 // pred_fallthru
        _
    $region6: #{tpu_custom_call.1} parent=1 // loop_footer
      %s18 = sadd.s32 1, %s14
    $region7: #{tpu_custom_call.1} parent=1 // loop_footer_branch
      %13 = sbr.rel target = $region3
    $region8: #{tpu_custom_call.1} parent=1 // loop_exit
      _
    %809 = vsyncpa [#allocation3], 1
    %s810 = scalar_lea.sflag [#allocation3], 1
    %811 = vsyncpa %s810, 1
    %812 = vsyncpa [#allocation4], 1
    %s813 = scalar_lea.sflag [#allocation4], 1
    %814 = vsyncpa %s813, 1

</llo_original>
